<compile_context>
chip_gen: v7x
topology: tpu7x:2x2x1
jax: 0.10.0
libtpu: 0.0.40
codegen_flags: <defaults>
</compile_context>

<pallas_src>
import math

import jax
import jax.numpy as jnp
from jax import lax
from jax.experimental import pallas as pl
from jax.experimental.pallas import tpu as pltpu


def _round_up(n, m):
    return ((n + m - 1) // m) * m


def _pad2d(x, shape):
    """Zero-pad a 2-D array up to `shape`; no-op (no copy) if already there."""
    r, c = x.shape
    R, C = shape
    if (r, c) == (R, C):
        return x
    return jnp.pad(x, ((0, R - r), (0, C - c)))


# ---------------------------------------------------------------------------
# Small-problem path: one fused kernel, all operands resident in VMEM.
# ---------------------------------------------------------------------------
def _make_fused_kernel(support_first, has_bias):
    def kernel(x_ref, w_ref, adj_ref, *rest):
        if has_bias:
            b_ref, out_ref = rest
        else:
            (out_ref,) = rest
        if support_first:
            # out = adj @ (x @ w)   (cheaper when Fo <= Fi)
            support = jnp.dot(x_ref[...], w_ref[...],
                              preferred_element_type=jnp.float32)
            out = jnp.dot(adj_ref[...], support.astype(adj_ref.dtype),
                          preferred_element_type=jnp.float32)
        else:
            # out = (adj @ x) @ w   (cheaper when Fi < Fo)
            agg = jnp.dot(adj_ref[...], x_ref[...],
                          preferred_element_type=jnp.float32)
            out = jnp.dot(agg.astype(w_ref.dtype), w_ref[...],
                          preferred_element_type=jnp.float32)
        if has_bias:
            out = out + b_ref[...]  # f32 bias add on the accumulator
        out_ref[...] = out.astype(out_ref.dtype)

    return kernel


# ---------------------------------------------------------------------------
# Large-graph path: (row_tile, k_tile) grid, K last, f32 accumulator scratch.
# ---------------------------------------------------------------------------
def _make_tiled_kernel(support_first, has_bias):
    def kernel(*refs):
        if has_bias:
            adj_ref, x_ref, w_ref, b_ref, out_ref, acc_ref = refs
        else:
            adj_ref, x_ref, w_ref, out_ref, acc_ref = refs
            b_ref = None
        k = pl.program_id(1)

        @pl.when(k == 0)
        def _init():
            acc_ref[...] = jnp.zeros_like(acc_ref)

        if support_first:
            # support tile = x[k] @ W ; acc(tm, fo) += adj[i, k] @ support
            s = jnp.dot(x_ref[...], w_ref[...],
                        preferred_element_type=jnp.float32)
            acc_ref[...] += jnp.dot(adj_ref[...], s.astype(adj_ref.dtype),
                                    preferred_element_type=jnp.float32)
        else:
            # acc(tm, fi) += adj[i, k] @ x[k]
            acc_ref[...] += jnp.dot(adj_ref[...], x_ref[...],
                                    preferred_element_type=jnp.float32)

        @pl.when(k == pl.num_programs(1) - 1)
        def _finalize():
            if support_first:
                out = acc_ref[...]
            else:
                out = jnp.dot(acc_ref[...].astype(w_ref.dtype), w_ref[...],
                              preferred_element_type=jnp.float32)
            if has_bias:
                out = out + b_ref[...]
            out_ref[...] = out.astype(out_ref.dtype)

    return kernel


# ---------------------------------------------------------------------------
# Wrapper: pad/cast operands, pick fused vs tiled path, slice result back.
# ---------------------------------------------------------------------------
def graph_convolution(x, adj, weight, bias=None, *,
                      tile_m=256, tile_k=256, force_tiled=False):
    """out = adj @ (x @ weight) + bias, matching GraphConvolution.forward."""
    N, Fi = x.shape
    Fo = weight.shape[1]
    assert adj.shape == (N, N)
    assert weight.shape[0] == Fi

    has_bias = bias is not None
    support_first = Fi >= Fo  # order by min(Fi, Fo) to shrink the N^2 term

    fi_p = _round_up(Fi, 128)  # lane-aligned feature dims
    fo_p = _round_up(Fo, 128)

    # bf16 MXU operands; f32 bias / output.
    w_p = _pad2d(weight.astype(jnp.bfloat16), (fi_p, fo_p))
    b_p = (_pad2d(bias.astype(jnp.float32).reshape(1, -1), (1, fo_p))
           if has_bias else None)

    # ---------------- fused single-launch path (small problems) -------------
    n8 = _round_up(N, 8)
    fused_bytes = (2 * (n8 * fi_p + fi_p * fo_p + n8 * n8)
                   + 4 * (n8 * max(fi_p, fo_p) + n8 * fo_p + fo_p))
    if not force_tiled and fused_bytes <= 12 * 1024 * 1024:
        x_p = _pad2d(x.astype(jnp.bfloat16), (n8, fi_p))
        adj_p = _pad2d(adj.astype(jnp.bfloat16), (n8, n8))
        vmem = pl.BlockSpec(memory_space=pltpu.MemorySpace.VMEM)
        operands = (x_p, w_p, adj_p) + ((b_p,) if has_bias else ())

        if support_first:
            flops = 2 * N * Fi * Fo + 2 * N * N * Fo
        else:
            flops = 2 * N * N * Fi + 2 * N * Fi * Fo
        bytes_accessed = 2 * (N * Fi + Fi * Fo + N * N) + 4 * (Fo + N * Fo)

        out_p = pl.pallas_call(
            _make_fused_kernel(support_first, has_bias),
            out_shape=jax.ShapeDtypeStruct((n8, fo_p), jnp.float32),
            in_specs=[vmem] * len(operands),
            out_specs=vmem,
            cost_estimate=pl.CostEstimate(
                flops=flops, transcendentals=0, bytes_accessed=bytes_accessed),
        )(*operands)
        return out_p[:N, :Fo]

    # ---------------- tiled path (large graphs) ------------------------------
    assert tile_k % 128 == 0 and tile_m % 8 == 0
    nm = _round_up(N, tile_m)
    nk = _round_up(N, tile_k)
    # TODO(synk): for very large N avoid this wrapper-side pad of adj (it adds
    # a full extra N^2 HBM write+read) by masking/zeroing the edge K-tile
    # inside the kernel instead.
    x_p = _pad2d(x.astype(jnp.bfloat16), (nk, fi_p))
    adj_p = _pad2d(adj.astype(jnp.bfloat16), (nm, nk))

    operands = (adj_p, x_p, w_p) + ((b_p,) if has_bias else ())
    in_specs = [
        pl.BlockSpec((tile_m, tile_k), lambda i, k: (i, k)),  # adj tile
        pl.BlockSpec((tile_k, fi_p), lambda i, k: (k, 0)),    # x K-slab
        pl.BlockSpec((fi_p, fo_p), lambda i, k: (0, 0)),      # W resident
    ]
    if has_bias:
        in_specs.append(pl.BlockSpec((1, fo_p), lambda i, k: (0, 0)))
    acc_cols = fo_p if support_first else fi_p

    out_p = pl.pallas_call(
        _make_tiled_kernel(support_first, has_bias),
        out_shape=jax.ShapeDtypeStruct((nm, fo_p), jnp.float32),
        grid_spec=pltpu.PrefetchScalarGridSpec(
            num_scalar_prefetch=0,
            grid=(nm // tile_m, nk // tile_k),
            in_specs=in_specs,
            out_specs=pl.BlockSpec((tile_m, fo_p), lambda i, k: (i, 0)),
            scratch_shapes=[pltpu.VMEM((tile_m, acc_cols), jnp.float32)],
        ),
        compiler_params=pltpu.CompilerParams(
            dimension_semantics=("parallel", "arbitrary"),
            vmem_limit_bytes=32 * 1024 * 1024,
        ),
    )(*operands)
    return out_p[:N, :Fo]


# ---------------------------------------------------------------------------
# Parameter init (matches PyTorch reset_parameters).
# ---------------------------------------------------------------------------
def init_params(key, in_features, out_features, with_bias=True):
    stdv = 1.0 / math.sqrt(out_features)
    k_w, k_b = jax.random.split(key)
    weight = jax.random.uniform(k_w, (in_features, out_features),
                                minval=-stdv, maxval=stdv, dtype=jnp.float32)
    bias = (jax.random.uniform(k_b, (out_features,),
                               minval=-stdv, maxval=stdv, dtype=jnp.float32)
            if with_bias else None)
    return weight, bias


def _make_gcn_inputs(key, n, fi, fo):
    k_param, k_x, k_adj = jax.random.split(key, 3)
    weight, bias = init_params(k_param, fi, fo, with_bias=True)
    x = jax.random.normal(k_x, (n, fi), dtype=jnp.float32)
    a_raw = (jax.random.uniform(k_adj, (n, n)) < 0.3).astype(jnp.float32)
    a_sym = jnp.maximum(a_raw, a_raw.T) + jnp.eye(n, dtype=jnp.float32)
    deg = jnp.sum(a_sym, axis=1)
    d_inv_sqrt = 1.0 / jnp.sqrt(deg)
    adj = a_sym * d_inv_sqrt[:, None] * d_inv_sqrt[None, :]
    return x, adj, weight, bias


def _ref_gcn(x, adj, weight, bias):
    support = jnp.matmul(x, weight, precision=lax.Precision.HIGHEST)
    out = jnp.matmul(adj, support, precision=lax.Precision.HIGHEST)
    return out + bias if bias is not None else out


def _check(out, ref, tol=3e-2):
    err = float(jnp.max(jnp.abs(out - ref)))
    scale = float(jnp.max(jnp.abs(ref))) + 1e-6
    assert err / scale < tol, (err, scale)


# ---------------------------------------------------------------------------
if __name__ == "__main__":
    key = jax.random.PRNGKey(0)
    k1, k2 = jax.random.split(key)

    # Small demo (fused single-launch path): 16 nodes, 8 -> 32 features.
    x, adj, weight, bias = _make_gcn_inputs(k1, 16, 8, 32)
    out = jax.block_until_ready(graph_convolution(x, adj, weight, bias))
    assert out.shape == (16, 32)
    _check(out, _ref_gcn(x, adj, weight, bias))

    # bias=None variant (statically compiled without the bias add / DMA).
    out_nb = jax.block_until_ready(graph_convolution(x, adj, weight, None))
    _check(out_nb, _ref_gcn(x, adj, weight, None))

    # Exercise the tiled large-graph path (grid = 2 x 2 row/K tiles).
    x2, adj2, w2, b2 = _make_gcn_inputs(k2, 256, 64, 128)
    out2 = jax.block_until_ready(
        graph_convolution(x2, adj2, w2, b2,
                          force_tiled=True, tile_m=128, tile_k=128))
    assert out2.shape == (256, 128)
    _check(out2, _ref_gcn(x2, adj2, w2, b2))

    print("KERNEL_OK")
</pallas_src>

<mosaic_0001>
module attributes {stable_mosaic.version = 11 : i64} {
  func.func @kernel(%arg0: memref<16x128xbf16, #tpu.memory_space<vmem>>, %arg1: memref<128x128xbf16, #tpu.memory_space<vmem>>, %arg2: memref<16x16xbf16, #tpu.memory_space<vmem>>, %arg3: memref<1x128xf32, #tpu.memory_space<vmem>>, %arg4: memref<16x128xf32, #tpu.memory_space<vmem>>) attributes {dimension_semantics = [], scalar_prefetch = 0 : i64, scratch_operands = 0 : i64, tpu.core_type = #tpu.core_type<tc>} {
    %c0 = arith.constant 0 : index
    %c0_0 = arith.constant 0 : index
    %0 = vector.load %arg2[%c0, %c0_0] : memref<16x16xbf16, #tpu.memory_space<vmem>>, vector<16x16xbf16>
    %c0_1 = arith.constant 0 : index
    %c0_2 = arith.constant 0 : index
    %1 = vector.load %arg0[%c0_1, %c0_2] : memref<16x128xbf16, #tpu.memory_space<vmem>>, vector<16x128xbf16>
    %cst = arith.constant dense<0.000000e+00> : vector<16x128xf32>
    %2 = tpu.matmul %0, %1, %cst {dimension_numbers = #tpu.dot_dimension_numbers<[1], [0], [0], [1], [0, 0, 1, 1], [], []>} : vector<16x16xbf16>, vector<16x128xbf16>, vector<16x128xf32> -> vector<16x128xf32>
    %3 = arith.truncf %2 : vector<16x128xf32> to vector<16x128xbf16>
    %c0_3 = arith.constant 0 : index
    %c0_4 = arith.constant 0 : index
    %4 = vector.load %arg1[%c0_3, %c0_4] : memref<128x128xbf16, #tpu.memory_space<vmem>>, vector<128x128xbf16>
    %cst_5 = arith.constant dense<0.000000e+00> : vector<16x128xf32>
    %5 = tpu.matmul %3, %4, %cst_5 {dimension_numbers = #tpu.dot_dimension_numbers<[1], [0], [0], [1], [0, 0, 1, 1], [], []>} : vector<16x128xbf16>, vector<128x128xbf16>, vector<16x128xf32> -> vector<16x128xf32>
    %c0_6 = arith.constant 0 : index
    %c0_7 = arith.constant 0 : index
    %6 = vector.load %arg3[%c0_6, %c0_7] : memref<1x128xf32, #tpu.memory_space<vmem>>, vector<1x128xf32>
    %7 = vector.broadcast %6 : vector<1x128xf32> to vector<16x128xf32>
    %8 = arith.addf %5, %7 : vector<16x128xf32>
    %c0_8 = arith.constant 0 : index
    %c0_9 = arith.constant 0 : index
    %9 = vector.load %arg4[%c0_8, %c0_9] : memref<16x128xf32, #tpu.memory_space<vmem>>, vector<16x128xf32>
    tpu.vector_store %arg4[%c0_8, %c0_9], %8 {strides = array<i32>} : memref<16x128xf32, #tpu.memory_space<vmem>>, vector<16x128xf32>,
    return
  }
}

</mosaic_0001>

<llo_original>
// kernel: tpu_custom_call.1
$region0: #{tpu_custom_call.1}
  #allocation0 [shape = 'u32[]', space=smem, size = 0x4, offset = 0x4, fixed_abs, tag = 'smem constant byte address 0x4 - core index']
  #allocation1 [shape = 'u32[144,128]{1,0:T(1,128)}', space=vmem, size = 0x12000, scoped, tag = 'internal scratch']
  %s0 = inlined_call_operand.hbm [shape: bf16[16,128], index: 0, kind: input, shape index: {}]
  %s1 = inlined_call_operand.hbm [shape: bf16[128,128], index: 1, kind: input, shape index: {}]
  %s2 = inlined_call_operand.hbm [shape: bf16[16,16], index: 2, kind: input, shape index: {}]
  %s3 = inlined_call_operand.vmem [shape: f32[1,128], index: 3, kind: input, shape index: {}]
  %s4 = inlined_call_operand.hbm [shape: f32[16,128], index: 4, kind: output, shape index: {}]
  %s5 = sld [smem:[#allocation0]]
  $region38: #{tpu_custom_call.1} parent=0
    _
  %s7 = ssub.s32 1, %s5
  %s8 = scalar_select 0, %s7, %s5
  $region1: #{tpu_custom_call.1} parent=0
    #allocation2 [shape = 'u8[4096]{0}', space=vmem, size = 0x1000, scoped, tag = 'input window, operand 0, single buffered']
    #allocation3 [shape = 's32[1]{0}', space=sflag, size = 0x4, scoped, tag = 'scoped memory for tpu_custom_call.1']
    #allocation4 [shape = 's32[1]{0}', space=sflag, size = 0x4, scoped, tag = 'scoped memory for tpu_custom_call.1']
    #allocation5 [shape = 'u8[32768]{0}', space=vmem, size = 0x8000, scoped, tag = 'input window, operand 1, single buffered']
    #allocation6 [shape = 's32[1]{0}', space=sflag, size = 0x4, scoped, tag = 'scoped memory for tpu_custom_call.1']
    #allocation7 [shape = 'u8[4096]{0}', space=vmem, size = 0x1000, scoped, tag = 'input window, operand 2, single buffered']
    #allocation8 [shape = 'u8[8192]{0}', space=vmem, size = 0x2000, scoped, tag = 'output window, operand 0, single buffered']
    %9 = vsyncpa [#allocation3], 0
    %10 = vsyncpa [#allocation6], 0
    %11 = vsyncpa [#allocation4], 0
    // Predicated region
    $region2: #{tpu_custom_call.1} parent=1 // pred_check
      _
    $region3: #{tpu_custom_call.1} parent=1 // pred_check_branch
      %13 = sbr.rel (0) target = $region5
    $region4: #{tpu_custom_call.1} parent=1 // pred_region
      %s15 = ssub.s32 128, 128
      %16 = vsyncadd [#allocation3], %s15
      %s17 = sshll.u32 [#allocation2], 4
      %s18 = int_to_ptr.vmem [resolvable:$true] %s17
      %23 = dma.hbm_to_vmem [thread:$0]  %s0, 128, %s18, [#allocation3], 64, 64, 4
    $region5: #{tpu_custom_call.1} parent=1 // pred_fallthru
      _
    // Predicated region
    $region6: #{tpu_custom_call.1} parent=1 // pred_check
      _
    $region7: #{tpu_custom_call.1} parent=1 // pred_check_branch
      %25 = sbr.rel (0) target = $region9
    $region8: #{tpu_custom_call.1} parent=1 // pred_region
      %s27 = ssub.s32 1024, 1024
      %28 = vsyncadd [#allocation6], %s27
      %s29 = sshll.u32 [#allocation5], 4
      %s30 = int_to_ptr.vmem [resolvable:$true] %s29
      %35 = dma.hbm_to_vmem [thread:$0]  %s1, 1024, %s30, [#allocation6], 64, 64, 4
    $region9: #{tpu_custom_call.1} parent=1 // pred_fallthru
      _
    // Predicated region
    $region10: #{tpu_custom_call.1} parent=1 // pred_check
      _
    $region11: #{tpu_custom_call.1} parent=1 // pred_check_branch
      %37 = sbr.rel (0) target = $region13
    $region12: #{tpu_custom_call.1} parent=1 // pred_region
      %s39 = ssub.s32 128, 128
      %40 = vsyncadd [#allocation6], %s39
      %s41 = sshll.u32 [#allocation7], 4
      %s42 = int_to_ptr.vmem [resolvable:$true] %s41
      %47 = dma.hbm_to_vmem [thread:$0]  %s2, 128, %s42, [#allocation6], 64, 64, 4
    $region13: #{tpu_custom_call.1} parent=1 // pred_fallthru
      _
    // Predicated region
    $region14: #{tpu_custom_call.1} parent=1 // pred_check
      _
    $region15: #{tpu_custom_call.1} parent=1 // pred_check_branch
      %49 = sbr.rel (0) target = $region17
    $region16: #{tpu_custom_call.1} parent=1 // pred_region
      _
    $region17: #{tpu_custom_call.1} parent=1 // pred_fallthru
      _
    // Predicated region
    $region18: #{tpu_custom_call.1} parent=1 // pred_check
      _
    $region19: #{tpu_custom_call.1} parent=1 // pred_check_branch
      %51 = sbr.rel (0) target = $region21
    $region20: #{tpu_custom_call.1} parent=1 // pred_region
      %52 = dma.done [#allocation3], 128
    $region21: #{tpu_custom_call.1} parent=1 // pred_fallthru
      _
    // Predicated region
    $region22: #{tpu_custom_call.1} parent=1 // pred_check
      _
    $region23: #{tpu_custom_call.1} parent=1 // pred_check_branch
      %54 = sbr.rel (0) target = $region25
    $region24: #{tpu_custom_call.1} parent=1 // pred_region
      %55 = dma.done [#allocation6], 1024
    $region25: #{tpu_custom_call.1} parent=1 // pred_fallthru
      _
    // Predicated region
    $region26: #{tpu_custom_call.1} parent=1 // pred_check
      _
    $region27: #{tpu_custom_call.1} parent=1 // pred_check_branch
      %57 = sbr.rel (0) target = $region29
    $region28: #{tpu_custom_call.1} parent=1 // pred_region
      %58 = dma.done [#allocation6], 128
    $region29: #{tpu_custom_call.1} parent=1 // pred_fallthru
      _
    %v60 = vld [vmem:[#allocation7] sm:$0xf]
    %v61 = vld [vmem:[#allocation7 + $0x4] sm:$0xf]
    %v62 = vld [vmem:[#allocation2] sm:$0xf]
    %v63 = vld [vmem:[#allocation2 + $0x4] sm:$0xf]
    %v66 = vunpack.c.l.b16 %v60
    %v67 = vunpack.c.l.b16 %v61
    %v68 = vpack.c.b16 %v67, %v66
    %v71 = vunpack.c.l.b16 %v62
    %v72 = vunpack.c.l.b16 %v63
    %v73 = vpack.c.b16 %v72, %v71
    %vm75 = vcmask 130048
    %v77 = vsel %vm75, %v68, 0
    %79 = vmatprep.subr.bf16.mxu0 0
    %80 = vmatpush1.bf16.msra.mxu0 %v73
    %81 = vmatprep.subr.bf16.mxu0 0
    %82 = vmatpush1.bf16.msra.mxu0 0
    %83 = vmatprep.subr.bf16.mxu0 0
    %84 = vmatpush1.bf16.msra.mxu0 0
    %85 = vmatprep.subr.bf16.mxu0 0
    %86 = vmatpush1.bf16.msra.mxu0 0
    %87 = vmatprep.subr.bf16.mxu0 0
    %88 = vmatpush1.bf16.msra.mxu0 0
    %89 = vmatprep.subr.bf16.mxu0 0
    %90 = vmatpush1.bf16.msra.mxu0 0
    %91 = vmatprep.subr.bf16.mxu0 0
    %92 = vmatpush1.bf16.msra.mxu0 0
    %93 = vmatprep.subr.bf16.mxu0 0
    %94 = vmatpush1.bf16.msra.mxu0 0
    %95 = vmatprep.subr.bf16.mxu0 0
    %96 = vmatpush1.bf16.msra.mxu0 0
    %97 = vmatprep.subr.bf16.mxu0 0
    %98 = vmatpush1.bf16.msra.mxu0 0
    %99 = vmatprep.subr.bf16.mxu0 0
    %100 = vmatpush1.bf16.msra.mxu0 0
    %101 = vmatprep.subr.bf16.mxu0 0
    %102 = vmatpush1.bf16.msra.mxu0 0
    %103 = vmatprep.subr.bf16.mxu0 0
    %104 = vmatpush1.bf16.msra.mxu0 0
    %105 = vmatprep.subr.bf16.mxu0 0
    %106 = vmatpush1.bf16.msra.mxu0 0
    %107 = vmatprep.subr.bf16.mxu0 0
    %108 = vmatpush1.bf16.msra.mxu0 0
    %109 = vmatprep.subr.bf16.mxu0 0
    %110 = vmatpush1.bf16.msra.mxu0 0
    %111 = vmatprep.mubr.bf16.mxu0 0
    %112 = vmatmul.mubr.bf16.gmra.mrb[0].mxu0 %v77
    %v113 = vpop.f32.mrb[0].mxu0
    %v114 = vadd.f32 0.0, %v113
    %v115 = vpop.f32.mrb[0].mxu0
    %v116 = vpop.f32.mrb[0].mxu0
    %v117 = vadd.f32 0.0, %v116
    %v118 = vpop.f32.mrb[0].mxu0
    %119 = vdwg.mxu0
    %v120 = vpack.c.bf16 %v117, %v114
    %v121 = vld [vmem:[#allocation5] sm:$0xf]
    %v122 = vld [vmem:[#allocation5 + $0x4] sm:$0xf]
    %v123 = vld [vmem:[#allocation5 + $0x8] sm:$0xf]
    %v124 = vld [vmem:[#allocation5 + $0xc] sm:$0xf]
    %v125 = vld [vmem:[#allocation5 + $0x10] sm:$0xf]
    %v126 = vld [vmem:[#allocation5 + $0x14] sm:$0xf]
    %v127 = vld [vmem:[#allocation5 + $0x18] sm:$0xf]
    %v128 = vld [vmem:[#allocation5 + $0x1c] sm:$0xf]
    %v129 = vld [vmem:[#allocation5 + $0x20] sm:$0xf]
    %v130 = vld [vmem:[#allocation5 + $0x24] sm:$0xf]
    %v131 = vld [vmem:[#allocation5 + $0x28] sm:$0xf]
    %v132 = vld [vmem:[#allocation5 + $0x2c] sm:$0xf]
    %v133 = vld [vmem:[#allocation5 + $0x30] sm:$0xf]
    %v134 = vld [vmem:[#allocation5 + $0x34] sm:$0xf]
    %v135 = vld [vmem:[#allocation5 + $0x38] sm:$0xf]
    %v136 = vld [vmem:[#allocation5 + $0x3c] sm:$0xf]
    %v137 = vld [vmem:[%s3] sm:$0x1]
    %v139 = vlaneseq
    %v140 = vshrl.u32 %v139, 7
    %v141 = vsub.s32 0, %v140
    %v142 = vrot.slane %v137, %v141
    %v160 = vunpack.c.l.b16 %v121
    %v161 = vunpack.c.l.b16 %v122
    %v162 = vunpack.c.l.b16 %v123
    %v163 = vunpack.c.l.b16 %v124
    %v164 = vunpack.c.l.b16 %v125
    %v165 = vunpack.c.l.b16 %v126
    %v166 = vunpack.c.l.b16 %v127
    %v167 = vunpack.c.l.b16 %v128
    %v168 = vunpack.c.l.b16 %v129
    %v169 = vunpack.c.l.b16 %v130
    %v170 = vunpack.c.l.b16 %v131
    %v171 = vunpack.c.l.b16 %v132
    %v172 = vunpack.c.l.b16 %v133
    %v173 = vunpack.c.l.b16 %v134
    %v174 = vunpack.c.l.b16 %v135
    %v175 = vunpack.c.l.b16 %v136
    %v176 = vpack.c.b16 %v161, %v160
    %v177 = vpack.c.b16 %v163, %v162
    %v178 = vpack.c.b16 %v165, %v164
    %v179 = vpack.c.b16 %v167, %v166
    %v180 = vpack.c.b16 %v169, %v168
    %v181 = vpack.c.b16 %v171, %v170
    %v182 = vpack.c.b16 %v173, %v172
    %v183 = vpack.c.b16 %v175, %v174
    %192 = vmatprep.subr.bf16.mxu0 0
    %193 = vmatpush1.bf16.msra.mxu0 %v176
    %194 = vmatprep.subr.bf16.mxu0 0
    %195 = vmatpush1.bf16.msra.mxu0 %v177
    %196 = vmatprep.subr.bf16.mxu0 0
    %197 = vmatpush1.bf16.msra.mxu0 %v178
    %198 = vmatprep.subr.bf16.mxu0 0
    %199 = vmatpush1.bf16.msra.mxu0 %v179
    %200 = vmatprep.subr.bf16.mxu0 0
    %201 = vmatpush1.bf16.msra.mxu0 %v180
    %202 = vmatprep.subr.bf16.mxu0 0
    %203 = vmatpush1.bf16.msra.mxu0 %v181
    %204 = vmatprep.subr.bf16.mxu0 0
    %205 = vmatpush1.bf16.msra.mxu0 %v182
    %206 = vmatprep.subr.bf16.mxu0 0
    %207 = vmatpush1.bf16.msra.mxu0 %v183
    %208 = vmatprep.subr.bf16.mxu0 0
    %209 = vmatpush1.bf16.msra.mxu0 0
    %210 = vmatprep.subr.bf16.mxu0 0
    %211 = vmatpush1.bf16.msra.mxu0 0
    %212 = vmatprep.subr.bf16.mxu0 0
    %213 = vmatpush1.bf16.msra.mxu0 0
    %214 = vmatprep.subr.bf16.mxu0 0
    %215 = vmatpush1.bf16.msra.mxu0 0
    %216 = vmatprep.subr.bf16.mxu0 0
    %217 = vmatpush1.bf16.msra.mxu0 0
    %218 = vmatprep.subr.bf16.mxu0 0
    %219 = vmatpush1.bf16.msra.mxu0 0
    %220 = vmatprep.subr.bf16.mxu0 0
    %221 = vmatpush1.bf16.msra.mxu0 0
    %222 = vmatprep.subr.bf16.mxu0 0
    %223 = vmatpush1.bf16.msra.mxu0 0
    %224 = vmatprep.mubr.bf16.mxu0 0
    %225 = vmatmul.mubr.bf16.gmra.mrb[0].mxu0 %v120
    %v226 = vpop.f32.mrb[0].mxu0
    %v227 = vadd.f32 %v142, %v226
    %v228 = vpop.f32.mrb[0].mxu0
    %v229 = vpop.f32.mrb[0].mxu0
    %v230 = vadd.f32 %v142, %v229
    %v231 = vpop.f32.mrb[0].mxu0
    %232 = vdwg.mxu0
    %233 = vst [vmem:[#allocation8] sm:$0xff] %v227
    %234 = vst [vmem:[#allocation8 + $0x8] sm:$0xff] %v230
    // Predicated region
    $region30: #{tpu_custom_call.1} parent=1 // pred_check
      _
    $region31: #{tpu_custom_call.1} parent=1 // pred_check_branch
      %236 = sbr.rel (0) target = $region33
    $region32: #{tpu_custom_call.1} parent=1 // pred_region
      %s238 = ssub.s32 256, 256
      %239 = vsyncadd [#allocation4], %s238
      %s240 = sshll.u32 [#allocation8], 4
      %s241 = int_to_ptr.vmem [resolvable:$true] %s240
      %246 = dma.vmem_to_hbm [thread:$0]  %s241, 256, %s4, [#allocation4], 128, 128, 8
    $region33: #{tpu_custom_call.1} parent=1 // pred_fallthru
      _
    // Predicated region
    $region34: #{tpu_custom_call.1} parent=1 // pred_check
      _
    $region35: #{tpu_custom_call.1} parent=1 // pred_check_branch
      %248 = sbr.rel (0) target = $region37
    $region36: #{tpu_custom_call.1} parent=1 // pred_region
      %249 = dma.done [#allocation4], 256
    $region37: #{tpu_custom_call.1} parent=1 // pred_fallthru
      _
    %250 = vsyncpa [#allocation3], 1
    %251 = vsyncpa [#allocation6], 1
    %252 = vsyncpa [#allocation4], 1

</llo_original>
